<compile_context>
chip_gen: v7x
topology: tpu7x:2x2x1
jax: 0.10.0
libtpu: 0.0.40
codegen_flags: <defaults>
</compile_context>

<pallas_src>
import functools

import jax
import jax.numpy as jnp
import numpy as np
from jax import lax
from jax.experimental import pallas as pl
from jax.experimental.pallas import tpu as pltpu

LANE = 128


def _round_up(n, m):
    return ((n + m - 1) // m) * m


# ----------------------------------------------------------------------------
# Fused kernel factory: all TemporalBlocks + MLP head in one kernel.
# Activations are (BT, L*C) flat; every op is a lane-dense matmul or VPU
# elementwise; no scratch buffers, no in-kernel scatter/reshape.
# ----------------------------------------------------------------------------
def _make_fused_kernel(cfg):
    """cfg: tuple of has_downsample flags, one per TemporalBlock."""

    def kernel(*refs):
        it = iter(refs)
        x_ref = next(it)
        blk_refs = []
        for has_ds in cfg:
            w1, b1, w2, b2 = next(it), next(it), next(it), next(it)
            wd = next(it) if has_ds else None
            bd = next(it) if has_ds else None
            blk_refs.append((w1, b1, w2, b2, wd, bd))
        fc1w_ref, fc1b_ref = next(it), next(it)
        fc2w_ref, fc2b_ref = next(it), next(it)
        o_ref = next(it)

        h = x_ref[...]                                     # (BT, L*Cin0) f32
        for (w1, b1, w2, b2, wd, bd) in blk_refs:
            x_in = h
            # conv1 (causal dilated, as block-Toeplitz matmul) -> ReLU.
            # Dropout is identity in eval mode.
            h = jnp.maximum(
                jnp.dot(h, w1[...], preferred_element_type=jnp.float32)
                + b1[...], 0.0)
            # conv2 -> ReLU.
            h = jnp.maximum(
                jnp.dot(h, w2[...], preferred_element_type=jnp.float32)
                + b2[...], 0.0)
            # Residual connection (1x1 downsample conv == block-diag Toeplitz).
            if wd is not None:
                res = (jnp.dot(x_in, wd[...],
                               preferred_element_type=jnp.float32) + bd[...])
            else:
                res = x_in
            h = jnp.maximum(h + res, 0.0)

        # MLP head. The torch flatten (B, L, C) -> (B, L*C) is a no-op in this
        # layout (column index is already l*C + c, channel fastest).
        a = jnp.maximum(h, 0.0)                            # module's extra ReLU
        a = jnp.maximum(
            jnp.dot(a, fc1w_ref[...], preferred_element_type=jnp.float32)
            + fc1b_ref[...], 0.0)
        o_ref[...] = (jnp.dot(a, fc2w_ref[...],
                              preferred_element_type=jnp.float32)
                      + fc2b_ref[...])

    return kernel


# ----------------------------------------------------------------------------
# One-time parameter preprocessing (hoisted out of the forward pass)
# ----------------------------------------------------------------------------
def _conv_toeplitz(w, L, dil):
    """(Cout, Cin, K) causal dilated conv -> (L*Cin, L*Cout) block-Toeplitz.

    Matches torch Conv1d(padding=(K-1)*dil) followed by Chomp1d((K-1)*dil):
        y[l'] = sum_k w[:, :, k] @ x[l' - (K-1-k)*dil]   (zero for l < 0).
    """
    w = np.asarray(w, dtype=np.float32)
    cout, cin, K = w.shape
    W = np.zeros((L * cin, L * cout), dtype=np.float32)
    for lp in range(L):
        for k in range(K):
            l = lp - (K - 1 - k) * dil
            if l < 0:
                continue
            W[l * cin:(l + 1) * cin, lp * cout:(lp + 1) * cout] += w[:, :, k].T
    return jnp.asarray(W)


def _downsample_toeplitz(wd, L):
    """(Cout, Cin) 1x1 conv -> block-diagonal (L*Cin, L*Cout)."""
    wd = np.asarray(wd, dtype=np.float32)
    cout, cin = wd.shape
    W = np.zeros((L * cin, L * cout), dtype=np.float32)
    for l in range(L):
        W[l * cin:(l + 1) * cin, l * cout:(l + 1) * cout] = wd.T
    return jnp.asarray(W)


def _tile_bias(b, L):
    b = np.asarray(b, dtype=np.float32)
    return jnp.asarray(np.tile(b, L).reshape(1, L * b.shape[0]))


def preprocess_params(params, *, kernel_size, seq_length):
    """Re-layout torch-style parameters into kernel layouts (done once)."""
    del kernel_size  # inferred from the weight shapes
    L = seq_length
    blocks = []
    for i, blk in enumerate(params["blocks"]):
        dil = 2 ** i
        entry = {
            "w1": _conv_toeplitz(blk["w1"], L, dil),
            "b1": _tile_bias(blk["b1"], L),
            "w2": _conv_toeplitz(blk["w2"], L, dil),
            "b2": _tile_bias(blk["b2"], L),
        }
        if blk.get("wd") is not None:
            entry["wd"] = _downsample_toeplitz(blk["wd"], L)
            entry["bd"] = _tile_bias(blk["bd"], L)
        blocks.append(entry)

    # fc1: (H, L*C) -> (L*C, H); flat layout already matches the torch flatten
    # order (channel fastest within each timestep).
    fc1_w = jnp.asarray(np.asarray(params["fc1_w"], np.float32).T)
    fc1_b = jnp.asarray(np.asarray(params["fc1_b"], np.float32).reshape(1, -1))
    # fc2: lane-pad the output dim to 128 for lane-dense stores.
    S, H = params["fc2_w"].shape
    S_pad = _round_up(S, LANE)
    fc2_w = np.zeros((H, S_pad), np.float32)
    fc2_w[:, :S] = np.asarray(params["fc2_w"], np.float32).T
    fc2_b = np.zeros((1, S_pad), np.float32)
    fc2_b[0, :S] = np.asarray(params["fc2_b"], np.float32)
    return {"blocks": blocks, "fc1_w": fc1_w, "fc1_b": fc1_b,
            "fc2_w": jnp.asarray(fc2_w), "fc2_b": jnp.asarray(fc2_b)}


# ----------------------------------------------------------------------------
# Forward pass: single fused pallas_call
# ----------------------------------------------------------------------------
@functools.partial(jax.jit, static_argnames=("output_steps", "batch_tile"))
def multistep_tcn_forward(x, kparams, *, output_steps, batch_tile=None):
    """x: (B, seq_length, n_variates) -> (B, output_steps).

    kparams: output of preprocess_params().
    batch_tile: None => one grid step over the 8-rounded batch (best for small
    B); else a multiple of 8, giving a "parallel" grid axis for core sharding
    at large B (v5e: BT*L >= 128; v6e/v7x: BT*L >= 256; v7x: >= 2 grid steps).
    """
    B, L, Cin0 = x.shape
    blocks = kparams["blocks"]
    S_pad = kparams["fc2_w"].shape[1]
    F_in = L * Cin0

    if batch_tile is None:
        BT = _round_up(B, 8)          # full (8,128)-aligned tiles for tiny B
    else:
        assert batch_tile % 8 == 0, "batch_tile must be a multiple of 8"
        BT = batch_tile
    Bp = _round_up(B, BT)
    num_bt = Bp // BT

    # Flatten to the lane-flat layout (column index = l*Cin0 + c) and pad batch.
    xw = x.astype(jnp.float32).reshape(B, F_in)
    if Bp != B:
        xw = jnp.pad(xw, ((0, Bp - B), (0, 0)))

    cfg = tuple("wd" in blk for blk in blocks)

    def rep(arr):  # full-array weight block, grid-invariant (VMEM-resident)
        nd = arr.ndim
        # TODO(synk): pipeline_mode=pl.Buffered(1) on these grid-invariant
        # specs to avoid double-buffering weights once large BT / bf16 weights
        # make VMEM pressure real.
        return pl.BlockSpec(arr.shape, lambda b, _nd=nd: (0,) * _nd)

    ins = [xw]
    in_specs = [pl.BlockSpec((BT, F_in), lambda b: (b, 0))]
    for blk in blocks:
        for name in ("w1", "b1", "w2", "b2"):
            ins.append(blk[name])
            in_specs.append(rep(blk[name]))
        if "wd" in blk:
            for name in ("wd", "bd"):
                ins.append(blk[name])
                in_specs.append(rep(blk[name]))
    for name in ("fc1_w", "fc1_b", "fc2_w", "fc2_b"):
        ins.append(kparams[name])
        in_specs.append(rep(kparams[name]))

    out = pl.pallas_call(
        _make_fused_kernel(cfg),
        out_shape=jax.ShapeDtypeStruct((Bp, S_pad), jnp.float32),
        grid_spec=pltpu.PrefetchScalarGridSpec(
            num_scalar_prefetch=0,
            grid=(num_bt,),
            in_specs=in_specs,
            out_specs=pl.BlockSpec((BT, S_pad), lambda b: (b, 0)),
        ),
        compiler_params=pltpu.CompilerParams(
            dimension_semantics=("parallel",)),
    )(*ins)
    return out[:B, :output_steps]


# ----------------------------------------------------------------------------
# Pure-JAX reference (mirrors the PyTorch module exactly, eval mode)
# ----------------------------------------------------------------------------
def ref_forward(x, params, kernel_size):
    B, L, _ = x.shape
    h = jnp.transpose(x, (0, 2, 1))  # (B, C, L), like torch NCL
    for i, blk in enumerate(params["blocks"]):
        dil = 2 ** i
        pad = (kernel_size - 1) * dil
        inp = h

        def conv(z, w, b):
            y = lax.conv_general_dilated(
                z, w, window_strides=(1,), padding=[(pad, pad)],
                rhs_dilation=(dil,), dimension_numbers=("NCH", "OIH", "NCH"))
            return y + b[None, :, None]

        y = jnp.maximum(conv(inp, blk["w1"], blk["b1"])[:, :, :L], 0.0)
        y = jnp.maximum(conv(y, blk["w2"], blk["b2"])[:, :, :L], 0.0)
        if blk.get("wd") is not None:
            res = jnp.einsum("bcl,oc->bol", inp, blk["wd"]) + blk["bd"][None, :, None]
        else:
            res = inp
        h = jnp.maximum(y + res, 0.0)
    out = jnp.transpose(h, (0, 2, 1)).reshape(B, -1)
    out = jnp.maximum(out, 0.0)
    out = jnp.maximum(out @ params["fc1_w"].T + params["fc1_b"], 0.0)
    return out @ params["fc2_w"].T + params["fc2_b"]


# ----------------------------------------------------------------------------
# Deterministic parameter init (synthetic; shapes per module __init__)
# ----------------------------------------------------------------------------
def init_params(key, n_variates, seq_length, output_steps, hidden_size, kernel_size):
    keys = iter(jax.random.split(key, 64))
    blocks = []
    cin = n_variates
    for cout in hidden_size:
        blk = {
            "w1": 0.01 * jax.random.normal(next(keys), (cout, cin, kernel_size), jnp.float32),
            "b1": 0.05 * jax.random.normal(next(keys), (cout,), jnp.float32),
            "w2": 0.01 * jax.random.normal(next(keys), (cout, cout, kernel_size), jnp.float32),
            "b2": 0.05 * jax.random.normal(next(keys), (cout,), jnp.float32),
        }
        if cin != cout:  # downsample Conv1d(kernel=1)
            blk["wd"] = 0.01 * jax.random.normal(next(keys), (cout, cin), jnp.float32)
            blk["bd"] = 0.05 * jax.random.normal(next(keys), (cout,), jnp.float32)
        blocks.append(blk)
        cin = cout
    feat = hidden_size[-1] * seq_length
    return {
        "blocks": blocks,
        "fc1_w": 0.05 * jax.random.normal(next(keys), (128, feat), jnp.float32),
        "fc1_b": 0.05 * jax.random.normal(next(keys), (128,), jnp.float32),
        "fc2_w": 0.05 * jax.random.normal(next(keys), (output_steps, 128), jnp.float32),
        "fc2_b": 0.05 * jax.random.normal(next(keys), (output_steps,), jnp.float32),
    }


if __name__ == "__main__":
    B = 2
    n_variates = 4
    seq_length = 8
    output_steps = 3
    hidden_size = [32, 32]   # block0: 4->32 (downsample), block1: 32->32 (identity res)
    kernel_size = 3

    key = jax.random.PRNGKey(0)
    kx, kp = jax.random.split(key)
    x = jax.random.normal(kx, (B, seq_length, n_variates), jnp.float32)
    params = init_params(kp, n_variates, seq_length, output_steps,
                         hidden_size, kernel_size)
    kparams = preprocess_params(params, kernel_size=kernel_size,
                                seq_length=seq_length)

    out = multistep_tcn_forward(x, kparams, output_steps=output_steps)
    out = jax.block_until_ready(out)

    ref = ref_forward(x, params, kernel_size)
    assert out.shape == (B, output_steps)
    np.testing.assert_allclose(np.asarray(out), np.asarray(ref),
                               rtol=1e-4, atol=1e-4)
    print("KERNEL_OK")
</pallas_src>

<mosaic_0001>
module attributes {stable_mosaic.version = 11 : i64} {
  func.func @kernel(%arg0: i32, %arg1: memref<8x32xf32, #tpu.memory_space<vmem>>, %arg2: memref<32x256xf32, #tpu.memory_space<vmem>>, %arg3: memref<1x256xf32, #tpu.memory_space<vmem>>, %arg4: memref<256x256xf32, #tpu.memory_space<vmem>>, %arg5: memref<1x256xf32, #tpu.memory_space<vmem>>, %arg6: memref<32x256xf32, #tpu.memory_space<vmem>>, %arg7: memref<1x256xf32, #tpu.memory_space<vmem>>, %arg8: memref<256x256xf32, #tpu.memory_space<vmem>>, %arg9: memref<1x256xf32, #tpu.memory_space<vmem>>, %arg10: memref<256x256xf32, #tpu.memory_space<vmem>>, %arg11: memref<1x256xf32, #tpu.memory_space<vmem>>, %arg12: memref<256x128xf32, #tpu.memory_space<vmem>>, %arg13: memref<1x128xf32, #tpu.memory_space<vmem>>, %arg14: memref<128x128xf32, #tpu.memory_space<vmem>>, %arg15: memref<1x128xf32, #tpu.memory_space<vmem>>, %arg16: memref<8x128xf32, #tpu.memory_space<vmem>>) attributes {dimension_semantics = [#tpu.dimension_semantics<parallel>], iteration_bounds = array<i64: 1>, scalar_prefetch = 0 : i64, scratch_operands = 0 : i64, tpu.core_type = #tpu.core_type<tc>, window_params = [{transform_indices = @transform_0, window_bounds = array<i64: 8, 32>}, {pipeline_mode = #tpu.pipeline_mode<synchronous>, transform_indices = @transform_1, window_bounds = array<i64: 32, 256>}, {pipeline_mode = #tpu.pipeline_mode<synchronous>, transform_indices = @transform_2, window_bounds = array<i64: 1, 256>}, {pipeline_mode = #tpu.pipeline_mode<synchronous>, transform_indices = @transform_3, window_bounds = array<i64: 256, 256>}, {pipeline_mode = #tpu.pipeline_mode<synchronous>, transform_indices = @transform_4, window_bounds = array<i64: 1, 256>}, {pipeline_mode = #tpu.pipeline_mode<synchronous>, transform_indices = @transform_5, window_bounds = array<i64: 32, 256>}, {pipeline_mode = #tpu.pipeline_mode<synchronous>, transform_indices = @transform_6, window_bounds = array<i64: 1, 256>}, {pipeline_mode = #tpu.pipeline_mode<synchronous>, transform_indices = @transform_7, window_bounds = array<i64: 256, 256>}, {pipeline_mode = #tpu.pipeline_mode<synchronous>, transform_indices = @transform_8, window_bounds = array<i64: 1, 256>}, {pipeline_mode = #tpu.pipeline_mode<synchronous>, transform_indices = @transform_9, window_bounds = array<i64: 256, 256>}, {pipeline_mode = #tpu.pipeline_mode<synchronous>, transform_indices = @transform_10, window_bounds = array<i64: 1, 256>}, {pipeline_mode = #tpu.pipeline_mode<synchronous>, transform_indices = @transform_11, window_bounds = array<i64: 256, 128>}, {pipeline_mode = #tpu.pipeline_mode<synchronous>, transform_indices = @transform_12, window_bounds = array<i64: 1, 128>}, {pipeline_mode = #tpu.pipeline_mode<synchronous>, transform_indices = @transform_13, window_bounds = array<i64: 128, 128>}, {pipeline_mode = #tpu.pipeline_mode<synchronous>, transform_indices = @transform_14, window_bounds = array<i64: 1, 128>}, {transform_indices = @transform_15, window_bounds = array<i64: 8, 128>}]} {
    %c0 = arith.constant 0 : index
    %c0_0 = arith.constant 0 : index
    %0 = vector.load %arg1[%c0, %c0_0] : memref<8x32xf32, #tpu.memory_space<vmem>>, vector<8x32xf32>
    %c0_1 = arith.constant 0 : index
    %c0_2 = arith.constant 0 : index
    %1 = vector.load %arg2[%c0_1, %c0_2] : memref<32x256xf32, #tpu.memory_space<vmem>>, vector<32x256xf32>
    %cst = arith.constant dense<0.000000e+00> : vector<8x256xf32>
    %2 = tpu.matmul %0, %1, %cst {dimension_numbers = #tpu.dot_dimension_numbers<[1], [0], [0], [1], [0, 0, 1, 1], [], []>} : vector<8x32xf32>, vector<32x256xf32>, vector<8x256xf32> -> vector<8x256xf32>
    %c0_3 = arith.constant 0 : index
    %c0_4 = arith.constant 0 : index
    %3 = vector.load %arg3[%c0_3, %c0_4] : memref<1x256xf32, #tpu.memory_space<vmem>>, vector<1x256xf32>
    %4 = vector.broadcast %3 : vector<1x256xf32> to vector<8x256xf32>
    %5 = arith.addf %2, %4 : vector<8x256xf32>
    %cst_5 = arith.constant 0.000000e+00 : f32
    %6 = vector.broadcast %cst_5 : f32 to vector<8x256xf32>
    %7 = arith.maximumf %5, %6 : vector<8x256xf32>
    %c0_6 = arith.constant 0 : index
    %c0_7 = arith.constant 0 : index
    %8 = vector.load %arg4[%c0_6, %c0_7] : memref<256x256xf32, #tpu.memory_space<vmem>>, vector<256x256xf32>
    %cst_8 = arith.constant dense<0.000000e+00> : vector<8x256xf32>
    %9 = tpu.matmul %7, %8, %cst_8 {dimension_numbers = #tpu.dot_dimension_numbers<[1], [0], [0], [1], [0, 0, 1, 1], [], []>} : vector<8x256xf32>, vector<256x256xf32>, vector<8x256xf32> -> vector<8x256xf32>
    %c0_9 = arith.constant 0 : index
    %c0_10 = arith.constant 0 : index
    %10 = vector.load %arg5[%c0_9, %c0_10] : memref<1x256xf32, #tpu.memory_space<vmem>>, vector<1x256xf32>
    %11 = vector.broadcast %10 : vector<1x256xf32> to vector<8x256xf32>
    %12 = arith.addf %9, %11 : vector<8x256xf32>
    %cst_11 = arith.constant 0.000000e+00 : f32
    %13 = vector.broadcast %cst_11 : f32 to vector<8x256xf32>
    %14 = arith.maximumf %12, %13 : vector<8x256xf32>
    %c0_12 = arith.constant 0 : index
    %c0_13 = arith.constant 0 : index
    %15 = vector.load %arg6[%c0_12, %c0_13] : memref<32x256xf32, #tpu.memory_space<vmem>>, vector<32x256xf32>
    %cst_14 = arith.constant dense<0.000000e+00> : vector<8x256xf32>
    %16 = tpu.matmul %0, %15, %cst_14 {dimension_numbers = #tpu.dot_dimension_numbers<[1], [0], [0], [1], [0, 0, 1, 1], [], []>} : vector<8x32xf32>, vector<32x256xf32>, vector<8x256xf32> -> vector<8x256xf32>
    %c0_15 = arith.constant 0 : index
    %c0_16 = arith.constant 0 : index
    %17 = vector.load %arg7[%c0_15, %c0_16] : memref<1x256xf32, #tpu.memory_space<vmem>>, vector<1x256xf32>
    %18 = vector.broadcast %17 : vector<1x256xf32> to vector<8x256xf32>
    %19 = arith.addf %16, %18 : vector<8x256xf32>
    %20 = arith.addf %14, %19 : vector<8x256xf32>
    %cst_17 = arith.constant 0.000000e+00 : f32
    %21 = vector.broadcast %cst_17 : f32 to vector<8x256xf32>
    %22 = arith.maximumf %20, %21 : vector<8x256xf32>
    %c0_18 = arith.constant 0 : index
    %c0_19 = arith.constant 0 : index
    %23 = vector.load %arg8[%c0_18, %c0_19] : memref<256x256xf32, #tpu.memory_space<vmem>>, vector<256x256xf32>
    %cst_20 = arith.constant dense<0.000000e+00> : vector<8x256xf32>
    %24 = tpu.matmul %22, %23, %cst_20 {dimension_numbers = #tpu.dot_dimension_numbers<[1], [0], [0], [1], [0, 0, 1, 1], [], []>} : vector<8x256xf32>, vector<256x256xf32>, vector<8x256xf32> -> vector<8x256xf32>
    %c0_21 = arith.constant 0 : index
    %c0_22 = arith.constant 0 : index
    %25 = vector.load %arg9[%c0_21, %c0_22] : memref<1x256xf32, #tpu.memory_space<vmem>>, vector<1x256xf32>
    %26 = vector.broadcast %25 : vector<1x256xf32> to vector<8x256xf32>
    %27 = arith.addf %24, %26 : vector<8x256xf32>
    %cst_23 = arith.constant 0.000000e+00 : f32
    %28 = vector.broadcast %cst_23 : f32 to vector<8x256xf32>
    %29 = arith.maximumf %27, %28 : vector<8x256xf32>
    %c0_24 = arith.constant 0 : index
    %c0_25 = arith.constant 0 : index
    %30 = vector.load %arg10[%c0_24, %c0_25] : memref<256x256xf32, #tpu.memory_space<vmem>>, vector<256x256xf32>
    %cst_26 = arith.constant dense<0.000000e+00> : vector<8x256xf32>
    %31 = tpu.matmul %29, %30, %cst_26 {dimension_numbers = #tpu.dot_dimension_numbers<[1], [0], [0], [1], [0, 0, 1, 1], [], []>} : vector<8x256xf32>, vector<256x256xf32>, vector<8x256xf32> -> vector<8x256xf32>
    %c0_27 = arith.constant 0 : index
    %c0_28 = arith.constant 0 : index
    %32 = vector.load %arg11[%c0_27, %c0_28] : memref<1x256xf32, #tpu.memory_space<vmem>>, vector<1x256xf32>
    %33 = vector.broadcast %32 : vector<1x256xf32> to vector<8x256xf32>
    %34 = arith.addf %31, %33 : vector<8x256xf32>
    %cst_29 = arith.constant 0.000000e+00 : f32
    %35 = vector.broadcast %cst_29 : f32 to vector<8x256xf32>
    %36 = arith.maximumf %34, %35 : vector<8x256xf32>
    %37 = arith.addf %36, %22 : vector<8x256xf32>
    %cst_30 = arith.constant 0.000000e+00 : f32
    %38 = vector.broadcast %cst_30 : f32 to vector<8x256xf32>
    %39 = arith.maximumf %37, %38 : vector<8x256xf32>
    %cst_31 = arith.constant 0.000000e+00 : f32
    %40 = vector.broadcast %cst_31 : f32 to vector<8x256xf32>
    %41 = arith.maximumf %39, %40 : vector<8x256xf32>
    %c0_32 = arith.constant 0 : index
    %c0_33 = arith.constant 0 : index
    %42 = vector.load %arg12[%c0_32, %c0_33] : memref<256x128xf32, #tpu.memory_space<vmem>>, vector<256x128xf32>
    %cst_34 = arith.constant dense<0.000000e+00> : vector<8x128xf32>
    %43 = tpu.matmul %41, %42, %cst_34 {dimension_numbers = #tpu.dot_dimension_numbers<[1], [0], [0], [1], [0, 0, 1, 1], [], []>} : vector<8x256xf32>, vector<256x128xf32>, vector<8x128xf32> -> vector<8x128xf32>
    %c0_35 = arith.constant 0 : index
    %c0_36 = arith.constant 0 : index
    %44 = vector.load %arg13[%c0_35, %c0_36] : memref<1x128xf32, #tpu.memory_space<vmem>>, vector<1x128xf32>
    %45 = vector.broadcast %44 : vector<1x128xf32> to vector<8x128xf32>
    %46 = arith.addf %43, %45 : vector<8x128xf32>
    %cst_37 = arith.constant 0.000000e+00 : f32
    %47 = vector.broadcast %cst_37 : f32 to vector<8x128xf32>
    %48 = arith.maximumf %46, %47 : vector<8x128xf32>
    %c0_38 = arith.constant 0 : index
    %c0_39 = arith.constant 0 : index
    %49 = vector.load %arg14[%c0_38, %c0_39] : memref<128x128xf32, #tpu.memory_space<vmem>>, vector<128x128xf32>
    %cst_40 = arith.constant dense<0.000000e+00> : vector<8x128xf32>
    %50 = tpu.matmul %48, %49, %cst_40 {dimension_numbers = #tpu.dot_dimension_numbers<[1], [0], [0], [1], [0, 0, 1, 1], [], []>} : vector<8x128xf32>, vector<128x128xf32>, vector<8x128xf32> -> vector<8x128xf32>
    %c0_41 = arith.constant 0 : index
    %c0_42 = arith.constant 0 : index
    %51 = vector.load %arg15[%c0_41, %c0_42] : memref<1x128xf32, #tpu.memory_space<vmem>>, vector<1x128xf32>
    %52 = vector.broadcast %51 : vector<1x128xf32> to vector<8x128xf32>
    %53 = arith.addf %50, %52 : vector<8x128xf32>
    %c0_43 = arith.constant 0 : index
    %c0_44 = arith.constant 0 : index
    %54 = vector.load %arg16[%c0_43, %c0_44] : memref<8x128xf32, #tpu.memory_space<vmem>>, vector<8x128xf32>
    tpu.vector_store %arg16[%c0_43, %c0_44], %53 {strides = array<i32>} : memref<8x128xf32, #tpu.memory_space<vmem>>, vector<8x128xf32>,
    return
  }
  func.func @transform_0(%arg0: i32) -> (i32, i32) {
    %c0_i32 = arith.constant 0 : i32
    %c0_i32_0 = arith.constant 0 : i32
    return %arg0, %c0_i32 : i32, i32
  }
  func.func @transform_1(%arg0: i32) -> (i32, i32) {
    %c0_i32 = arith.constant 0 : i32
    %c0_i32_0 = arith.constant 0 : i32
    %c0_i32_1 = arith.constant 0 : i32
    return %c0_i32, %c0_i32_0 : i32, i32
  }
  func.func @transform_2(%arg0: i32) -> (i32, i32) {
    %c0_i32 = arith.constant 0 : i32
    %c0_i32_0 = arith.constant 0 : i32
    %c0_i32_1 = arith.constant 0 : i32
    return %c0_i32, %c0_i32_0 : i32, i32
  }
  func.func @transform_3(%arg0: i32) -> (i32, i32) {
    %c0_i32 = arith.constant 0 : i32
    %c0_i32_0 = arith.constant 0 : i32
    %c0_i32_1 = arith.constant 0 : i32
    return %c0_i32, %c0_i32_0 : i32, i32
  }
  func.func @transform_4(%arg0: i32) -> (i32, i32) {
    %c0_i32 = arith.constant 0 : i32
    %c0_i32_0 = arith.constant 0 : i32
    %c0_i32_1 = arith.constant 0 : i32
    return %c0_i32, %c0_i32_0 : i32, i32
  }
  func.func @transform_5(%arg0: i32) -> (i32, i32) {
    %c0_i32 = arith.constant 0 : i32
    %c0_i32_0 = arith.constant 0 : i32
    %c0_i32_1 = arith.constant 0 : i32
    return %c0_i32, %c0_i32_0 : i32, i32
  }
  func.func @transform_6(%arg0: i32) -> (i32, i32) {
    %c0_i32 = arith.constant 0 : i32
    %c0_i32_0 = arith.constant 0 : i32
    %c0_i32_1 = arith.constant 0 : i32
    return %c0_i32, %c0_i32_0 : i32, i32
  }
  func.func @transform_7(%arg0: i32) -> (i32, i32) {
    %c0_i32 = arith.constant 0 : i32
    %c0_i32_0 = arith.constant 0 : i32
    %c0_i32_1 = arith.constant 0 : i32
    return %c0_i32, %c0_i32_0 : i32, i32
  }
  func.func @transform_8(%arg0: i32) -> (i32, i32) {
    %c0_i32 = arith.constant 0 : i32
    %c0_i32_0 = arith.constant 0 : i32
    %c0_i32_1 = arith.constant 0 : i32
    return %c0_i32, %c0_i32_0 : i32, i32
  }
  func.func @transform_9(%arg0: i32) -> (i32, i32) {
    %c0_i32 = arith.constant 0 : i32
    %c0_i32_0 = arith.constant 0 : i32
    %c0_i32_1 = arith.constant 0 : i32
    return %c0_i32, %c0_i32_0 : i32, i32
  }
  func.func @transform_10(%arg0: i32) -> (i32, i32) {
    %c0_i32 = arith.constant 0 : i32
    %c0_i32_0 = arith.constant 0 : i32
    %c0_i32_1 = arith.constant 0 : i32
    return %c0_i32, %c0_i32_0 : i32, i32
  }
  func.func @transform_11(%arg0: i32) -> (i32, i32) {
    %c0_i32 = arith.constant 0 : i32
    %c0_i32_0 = arith.constant 0 : i32
    %c0_i32_1 = arith.constant 0 : i32
    return %c0_i32, %c0_i32_0 : i32, i32
  }
  func.func @transform_12(%arg0: i32) -> (i32, i32) {
    %c0_i32 = arith.constant 0 : i32
    %c0_i32_0 = arith.constant 0 : i32
    %c0_i32_1 = arith.constant 0 : i32
    return %c0_i32, %c0_i32_0 : i32, i32
  }
  func.func @transform_13(%arg0: i32) -> (i32, i32) {
    %c0_i32 = arith.constant 0 : i32
    %c0_i32_0 = arith.constant 0 : i32
    %c0_i32_1 = arith.constant 0 : i32
    return %c0_i32, %c0_i32_0 : i32, i32
  }
  func.func @transform_14(%arg0: i32) -> (i32, i32) {
    %c0_i32 = arith.constant 0 : i32
    %c0_i32_0 = arith.constant 0 : i32
    %c0_i32_1 = arith.constant 0 : i32
    return %c0_i32, %c0_i32_0 : i32, i32
  }
  func.func @transform_15(%arg0: i32) -> (i32, i32) {
    %c0_i32 = arith.constant 0 : i32
    %c0_i32_0 = arith.constant 0 : i32
    return %arg0, %c0_i32 : i32, i32
  }
}

</mosaic_0001>

<llo_original>
// kernel: multistep_tcn_forward.1
$region0: #{multistep_tcn_forward.1}
  #allocation0 [shape = 'u32[]', space=smem, size = 0x4, offset = 0x4, fixed_abs, tag = 'smem constant byte address 0x4 - core index']
  #allocation1 [shape = 'u32[144,128]{1,0:T(1,128)}', space=vmem, size = 0x12000, scoped, tag = 'internal scratch']
  %s0 = inlined_call_operand.vmem [shape: f32[8,32], index: 0, kind: input, shape index: {}]
  %s1 = inlined_call_operand.vmem [shape: f32[32,256], index: 1, kind: input, shape index: {}]
  %s2 = inlined_call_operand.vmem [shape: f32[1,256], index: 2, kind: input, shape index: {}]
  %s3 = inlined_call_operand.hbm [shape: f32[256,256], index: 3, kind: input, shape index: {}]
  %s4 = inlined_call_operand.vmem [shape: f32[1,256], index: 4, kind: input, shape index: {}]
  %s5 = inlined_call_operand.hbm [shape: f32[32,256], index: 5, kind: input, shape index: {}]
  %s6 = inlined_call_operand.hbm [shape: f32[1,256], index: 6, kind: input, shape index: {}]
  %s7 = inlined_call_operand.hbm [shape: f32[256,256], index: 7, kind: input, shape index: {}]
  %s8 = inlined_call_operand.vmem [shape: f32[1,256], index: 8, kind: input, shape index: {}]
  %s9 = inlined_call_operand.hbm [shape: f32[256,256], index: 9, kind: input, shape index: {}]
  %s10 = inlined_call_operand.vmem [shape: f32[1,256], index: 10, kind: input, shape index: {}]
  %s11 = inlined_call_operand.hbm [shape: f32[256,128], index: 11, kind: input, shape index: {}]
  %s12 = inlined_call_operand.vmem [shape: f32[1,128], index: 12, kind: input, shape index: {}]
  %s13 = inlined_call_operand.hbm [shape: f32[128,128], index: 13, kind: input, shape index: {}]
  %s14 = inlined_call_operand.vmem [shape: f32[1,128], index: 14, kind: input, shape index: {}]
  %s15 = inlined_call_operand.vmem [shape: f32[8,128], index: 15, kind: output, shape index: {}]
  %s16 = sld [smem:[#allocation0]]
  $region98: #{multistep_tcn_forward.1} parent=0
    _
  %s18 = ssub.s32 1, %s16
  %s19 = scalar_select 0, %s18, %s16
  $region1: #{multistep_tcn_forward.1} parent=0
    #allocation2 [shape = 'u8[262144]{0}', space=vmem, size = 0x40000, scoped, tag = 'input window, operand 3, single buffered']
    #allocation3 [shape = 's32[1]{0}', space=sflag, size = 0x4, scoped, tag = 'scoped memory for multistep_tcn_forward.1']
    #allocation4 [shape = 'u8[32768]{0}', space=vmem, size = 0x8000, scoped, tag = 'input window, operand 5, single buffered']
    #allocation5 [shape = 's32[1]{0}', space=sflag, size = 0x4, scoped, tag = 'scoped memory for multistep_tcn_forward.1']
    #allocation6 [shape = 'u8[1024]{0}', space=vmem, size = 0x400, scoped, tag = 'input window, operand 6, single buffered']
    #allocation7 [shape = 'u8[262144]{0}', space=vmem, size = 0x40000, scoped, tag = 'input window, operand 7, single buffered']
    #allocation8 [shape = 's32[1]{0}', space=sflag, size = 0x4, scoped, tag = 'scoped memory for multistep_tcn_forward.1']
    #allocation9 [shape = 'u8[262144]{0}', space=vmem, size = 0x40000, scoped, tag = 'input window, operand 9, single buffered']
    #allocation10 [shape = 'u8[131072]{0}', space=vmem, size = 0x20000, scoped, tag = 'input window, operand 11, single buffered']
    #allocation11 [shape = 's32[1]{0}', space=sflag, size = 0x4, scoped, tag = 'scoped memory for multistep_tcn_forward.1']
    #allocation12 [shape = 'u8[65536]{0}', space=vmem, size = 0x10000, scoped, tag = 'input window, operand 13, single buffered']
    %20 = vsyncpa [#allocation3], 0
    %21 = vsyncpa [#allocation5], 0
    %22 = vsyncpa [#allocation8], 0
    %23 = vsyncpa [#allocation11], 0
    // Predicated region
    $region2: #{multistep_tcn_forward.1} parent=1 // pred_check
      _
    $region3: #{multistep_tcn_forward.1} parent=1 // pred_check_branch
      %25 = sbr.rel (0) target = $region5
    $region4: #{multistep_tcn_forward.1} parent=1 // pred_region
      _
    $region5: #{multistep_tcn_forward.1} parent=1 // pred_fallthru
      _
    // Predicated region
    $region6: #{multistep_tcn_forward.1} parent=1 // pred_check
      _
    $region7: #{multistep_tcn_forward.1} parent=1 // pred_check_branch
      %27 = sbr.rel (0) target = $region9
    $region8: #{multistep_tcn_forward.1} parent=1 // pred_region
      _
    $region9: #{multistep_tcn_forward.1} parent=1 // pred_fallthru
      _
    // Predicated region
    $region10: #{multistep_tcn_forward.1} parent=1 // pred_check
      _
    $region11: #{multistep_tcn_forward.1} parent=1 // pred_check_branch
      %29 = sbr.rel (0) target = $region13
    $region12: #{multistep_tcn_forward.1} parent=1 // pred_region
      _
    $region13: #{multistep_tcn_forward.1} parent=1 // pred_fallthru
      _
    // Predicated region
    $region14: #{multistep_tcn_forward.1} parent=1 // pred_check
      _
    $region15: #{multistep_tcn_forward.1} parent=1 // pred_check_branch
      %31 = sbr.rel (0) target = $region17
    $region16: #{multistep_tcn_forward.1} parent=1 // pred_region
      %s33 = ssub.s32 8192, 8192
      %34 = vsyncadd [#allocation3], %s33
      %s35 = sshll.u32 [#allocation2], 4
      %s36 = int_to_ptr.vmem [resolvable:$true] %s35
      %41 = dma.hbm_to_vmem [thread:$0]  %s3, 8192, %s36, [#allocation3], 256, 256, 16
    $region17: #{multistep_tcn_forward.1} parent=1 // pred_fallthru
      _
    // Predicated region
    $region18: #{multistep_tcn_forward.1} parent=1 // pred_check
      _
    $region19: #{multistep_tcn_forward.1} parent=1 // pred_check_branch
      %43 = sbr.rel (0) target = $region21
    $region20: #{multistep_tcn_forward.1} parent=1 // pred_region
      _
    $region21: #{multistep_tcn_forward.1} parent=1 // pred_fallthru
      _
    // Predicated region
    $region22: #{multistep_tcn_forward.1} parent=1 // pred_check
      _
    $region23: #{multistep_tcn_forward.1} parent=1 // pred_check_branch
      %45 = sbr.rel (0) target = $region25
    $region24: #{multistep_tcn_forward.1} parent=1 // pred_region
      %s47 = ssub.s32 1024, 1024
      %48 = vsyncadd [#allocation5], %s47
      %s49 = sshll.u32 [#allocation4], 4
      %s50 = int_to_ptr.vmem [resolvable:$true] %s49
      %55 = dma.hbm_to_vmem [thread:$0]  %s5, 1024, %s50, [#allocation5], 256, 256, 16
    $region25: #{multistep_tcn_forward.1} parent=1 // pred_fallthru
      _
    // Predicated region
    $region26: #{multistep_tcn_forward.1} parent=1 // pred_check
      _
    $region27: #{multistep_tcn_forward.1} parent=1 // pred_check_branch
      %57 = sbr.rel (0) target = $region29
    $region28: #{multistep_tcn_forward.1} parent=1 // pred_region
      %s59 = ssub.s32 32, 32
      %60 = vsyncadd [#allocation5], %s59
      %s62 = sshll.u32 [#allocation6], 4
      %s63 = int_to_ptr.vmem [resolvable:$true] %s62
      %65 = dma.hbm_to_vmem [thread:$0]  %s6, 32, %s63, [#allocation5]
    $region29: #{multistep_tcn_forward.1} parent=1 // pred_fallthru
      _
    // Predicated region
    $region30: #{multistep_tcn_forward.1} parent=1 // pred_check
      _
    $region31: #{multistep_tcn_forward.1} parent=1 // pred_check_branch
      %67 = sbr.rel (0) target = $region33
    $region32: #{multistep_tcn_forward.1} parent=1 // pred_region
      %s69 = ssub.s32 8192, 8192
      %70 = vsyncadd [#allocation8], %s69
      %s71 = sshll.u32 [#allocation7], 4
      %s72 = int_to_ptr.vmem [resolvable:$true] %s71
      %77 = dma.hbm_to_vmem [thread:$0]  %s7, 8192, %s72, [#allocation8], 256, 256, 16
    $region33: #{multistep_tcn_forward.1} parent=1 // pred_fallthru
      _
    // Predicated region
    $region34: #{multistep_tcn_forward.1} parent=1 // pred_check
      _
    $region35: #{multistep_tcn_forward.1} parent=1 // pred_check_branch
      %79 = sbr.rel (0) target = $region37
    $region36: #{multistep_tcn_forward.1} parent=1 // pred_region
      _
    $region37: #{multistep_tcn_forward.1} parent=1 // pred_fallthru
      _
    // Predicated region
    $region38: #{multistep_tcn_forward.1} parent=1 // pred_check
      _
    $region39: #{multistep_tcn_forward.1} parent=1 // pred_check_branch
      %81 = sbr.rel (0) target = $region41
    $region40: #{multistep_tcn_forward.1} parent=1 // pred_region
      %s83 = ssub.s32 8192, 8192
      %84 = vsyncadd [#allocation8], %s83
      %s85 = sshll.u32 [#allocation9], 4
      %s86 = int_to_ptr.vmem [resolvable:$true] %s85
      %91 = dma.hbm_to_vmem [thread:$0]  %s9, 8192, %s86, [#allocation8], 256, 256, 16
    $region41: #{multistep_tcn_forward.1} parent=1 // pred_fallthru
      _
    // Predicated region
    $region42: #{multistep_tcn_forward.1} parent=1 // pred_check
      _
    $region43: #{multistep_tcn_forward.1} parent=1 // pred_check_branch
      %93 = sbr.rel (0) target = $region45
    $region44: #{multistep_tcn_forward.1} parent=1 // pred_region
      _
    $region45: #{multistep_tcn_forward.1} parent=1 // pred_fallthru
      _
    // Predicated region
    $region46: #{multistep_tcn_forward.1} parent=1 // pred_check
      _
    $region47: #{multistep_tcn_forward.1} parent=1 // pred_check_branch
      %95 = sbr.rel (0) target = $region49
    $region48: #{multistep_tcn_forward.1} parent=1 // pred_region
      %s97 = ssub.s32 4096, 4096
      %98 = vsyncadd [#allocation11], %s97
      %s99 = sshll.u32 [#allocation10], 4
      %s100 = int_to_ptr.vmem [resolvable:$true] %s99
      %105 = dma.hbm_to_vmem [thread:$0]  %s11, 4096, %s100, [#allocation11], 128, 128, 8
    $region49: #{multistep_tcn_forward.1} parent=1 // pred_fallthru
      _
    // Predicated region
    $region50: #{multistep_tcn_forward.1} parent=1 // pred_check
      _
    $region51: #{multistep_tcn_forward.1} parent=1 // pred_check_branch
      %107 = sbr.rel (0) target = $region53
    $region52: #{multistep_tcn_forward.1} parent=1 // pred_region
      _
    $region53: #{multistep_tcn_forward.1} parent=1 // pred_fallthru
      _
    // Predicated region
    $region54: #{multistep_tcn_forward.1} parent=1 // pred_check
      _
    $region55: #{multistep_tcn_forward.1} parent=1 // pred_check_branch
      %109 = sbr.rel (0) target = $region57
    $region56: #{multistep_tcn_forward.1} parent=1 // pred_region
      %s111 = ssub.s32 2048, 2048
      %112 = vsyncadd [#allocation11], %s111
      %s113 = sshll.u32 [#allocation12], 4
      %s114 = int_to_ptr.vmem [resolvable:$true] %s113
      %119 = dma.hbm_to_vmem [thread:$0]  %s13, 2048, %s114, [#allocation11], 128, 128, 8
    $region57: #{multistep_tcn_forward.1} parent=1 // pred_fallthru
      _
    // Predicated region
    $region58: #{multistep_tcn_forward.1} parent=1 // pred_check
      _
    $region59: #{multistep_tcn_forward.1} parent=1 // pred_check_branch
      %121 = sbr.rel (0) target = $region61
    $region60: #{multistep_tcn_forward.1} parent=1 // pred_region
      _
    $region61: #{multistep_tcn_forward.1} parent=1 // pred_fallthru
      _
    // Predicated region
    $region62: #{multistep_tcn_forward.1} parent=1 // pred_check
      _
    $region63: #{multistep_tcn_forward.1} parent=1 // pred_check_branch
      %123 = sbr.rel (0) target = $region65
    $region64: #{multistep_tcn_forward.1} parent=1 // pred_region
      %124 = dma.done [#allocation3], 8192
    $region65: #{multistep_tcn_forward.1} parent=1 // pred_fallthru
      _
    // Predicated region
    $region66: #{multistep_tcn_forward.1} parent=1 // pred_check
      _
    $region67: #{multistep_tcn_forward.1} parent=1 // pred_check_branch
      %126 = sbr.rel (0) target = $region69
    $region68: #{multistep_tcn_forward.1} parent=1 // pred_region
      %127 = dma.done [#allocation5], 1024
    $region69: #{multistep_tcn_forward.1} parent=1 // pred_fallthru
      _
    // Predicated region
    $region70: #{multistep_tcn_forward.1} parent=1 // pred_check
      _
    $region71: #{multistep_tcn_forward.1} parent=1 // pred_check_branch
      %129 = sbr.rel (0) target = $region73
    $region72: #{multistep_tcn_forward.1} parent=1 // pred_region
      %130 = dma.done [#allocation5], 32
    $region73: #{multistep_tcn_forward.1} parent=1 // pred_fallthru
      _
    // Predicated region
    $region74: #{multistep_tcn_forward.1} parent=1 // pred_check
      _
    $region75: #{multistep_tcn_forward.1} parent=1 // pred_check_branch
      %132 = sbr.rel (0) target = $region77
    $region76: #{multistep_tcn_forward.1} parent=1 // pred_region
      %133 = dma.done [#allocation8], 8192
    $region77: #{multistep_tcn_forward.1} parent=1 // pred_fallthru
      _
    // Predicated region
    $region78: #{multistep_tcn_forward.1} parent=1 // pred_check
      _
    $region79: #{multistep_tcn_forward.1} parent=1 // pred_check_branch
      %135 = sbr.rel (0) target = $region81
    $region80: #{multistep_tcn_forward.1} parent=1 // pred_region
      %136 = dma.done [#allocation8], 8192
    $region81: #{multistep_tcn_forward.1} parent=1 // pred_fallthru
      _
    // Predicated region
    $region82: #{multistep_tcn_forward.1} parent=1 // pred_check
      _
    $region83: #{multistep_tcn_forward.1} parent=1 // pred_check_branch
      %138 = sbr.rel (0) target = $region85
    $region84: #{multistep_tcn_forward.1} parent=1 // pred_region
      %139 = dma.done [#allocation11], 4096
    $region85: #{multistep_tcn_forward.1} parent=1 // pred_fallthru
      _
    // Predicated region
    $region86: #{multistep_tcn_forward.1} parent=1 // pred_check
      _
    $region87: #{multistep_tcn_forward.1} parent=1 // pred_check_branch
      %141 = sbr.rel (0) target = $region89
    $region88: #{multistep_tcn_forward.1} parent=1 // pred_region
      %142 = dma.done [#allocation11], 2048
    $region89: #{multistep_tcn_forward.1} parent=1 // pred_fallthru
      _
    %v143 = vld [vmem:[%s0] sm:$0xff]
    %v144 = vld [vmem:[%s1] sm:$0xff]
    %v145 = vld [vmem:[%s1 + $0x8] sm:$0xff]
    %v146 = vld [vmem:[%s1 + $0x10] sm:$0xff]
    %v147 = vld [vmem:[%s1 + $0x18] sm:$0xff]
    %v148 = vld [vmem:[%s1 + $0x20] sm:$0xff]
    %v149 = vld [vmem:[%s1 + $0x28] sm:$0xff]
    %v150 = vld [vmem:[%s1 + $0x30] sm:$0xff]
    %v151 = vld [vmem:[%s1 + $0x38] sm:$0xff]
    %v152 = vld [vmem:[%s2] sm:$0x3]
    %v154 = vlaneseq
    %v155 = vshrl.u32 %v154, 7
    %v156 = vsub.s32 0, %v155
    %v157 = vrot.slane %v152, %v156
    %v158 = vlaneseq
    %v159 = vshrl.u32 %v158, 7
    %v160 = vsub.s32 1, %v159
    %v161 = vrot.slane %v152, %v160
    %vm164 = vcmask 261120
    %v166 = vsel %vm164, %v143, 0
    %168 = vmatprep.subr.mxu0 %v145
    %169 = vmatpush1.msra.mxu0 %v144
    %170 = vmatprep.subr.mxu0 %v147
    %171 = vmatpush1.msra.mxu0 %v146
    %172 = vmatprep.subr.mxu0 %v149
    %173 = vmatpush1.msra.mxu0 %v148
    %174 = vmatprep.subr.mxu0 %v151
    %175 = vmatpush1.msra.mxu0 %v150
    %176 = vmatprep.subr.mxu0 0.0
    %177 = vmatpush1.msra.mxu0 0.0
    %178 = vmatprep.subr.mxu0 0.0
    %179 = vmatpush1.msra.mxu0 0.0
    %180 = vmatprep.subr.mxu0 0.0
    %181 = vmatpush1.msra.mxu0 0.0
    %182 = vmatprep.subr.mxu0 0.0
    %183 = vmatpush1.msra.mxu0 0.0
    %184 = vmatprep.subr.mxu0 0.0
    %185 = vmatpush1.msra.mxu0 0.0
    %186 = vmatprep.subr.mxu0 0.0
    %187 = vmatpush1.msra.mxu0 0.0
    %188 = vmatprep.subr.mxu0 0.0
    %189 = vmatpush1.msra.mxu0 0.0
    %190 = vmatprep.subr.mxu0 0.0
    %191 = vmatpush1.msra.mxu0 0.0
    %192 = vmatprep.subr.mxu0 0.0
    %193 = vmatpush1.msra.mxu0 0.0
    %194 = vmatprep.subr.mxu0 0.0
    %195 = vmatpush1.msra.mxu0 0.0
    %196 = vmatprep.subr.mxu0 0.0
    %197 = vmatpush1.msra.mxu0 0.0
    %198 = vmatprep.subr.mxu0 0.0
    %199 = vmatpush1.msra.mxu0 0.0
    %200 = vmatprep.subr.mxu0 0.0
    %201 = vmatpush1.msra.mxu0 0.0
    %202 = vmatprep.subr.mxu0 0.0
    %203 = vmatpush1.msra.mxu0 0.0
    %204 = vmatprep.subr.mxu0 0.0
    %205 = vmatpush1.msra.mxu0 0.0
    %206 = vmatprep.subr.mxu0 0.0
    %207 = vmatpush1.msra.mxu0 0.0
    %208 = vmatprep.subr.mxu0 0.0
    %209 = vmatpush1.msra.mxu0 0.0
    %210 = vmatprep.subr.mxu0 0.0
    %211 = vmatpush1.msra.mxu0 0.0
    %212 = vmatprep.subr.mxu0 0.0
    %213 = vmatpush1.msra.mxu0 0.0
    %214 = vmatprep.subr.mxu0 0.0
    %215 = vmatpush1.msra.mxu0 0.0
    %216 = vmatprep.subr.mxu0 0.0
    %217 = vmatpush1.msra.mxu0 0.0
    %218 = vmatprep.subr.mxu0 0.0
    %219 = vmatpush1.msra.mxu0 0.0
    %220 = vmatprep.subr.mxu0 0.0
    %221 = vmatpush1.msra.mxu0 0.0
    %222 = vmatprep.subr.mxu0 0.0
    %223 = vmatpush1.msra.mxu0 0.0
    %224 = vmatprep.subr.mxu0 0.0
    %225 = vmatpush1.msra.mxu0 0.0
    %226 = vmatprep.subr.mxu0 0.0
    %227 = vmatpush1.msra.mxu0 0.0
    %228 = vmatprep.subr.mxu0 0.0
    %229 = vmatpush1.msra.mxu0 0.0
    %230 = vmatprep.subr.mxu0 0.0
    %231 = vmatpush1.msra.mxu0 0.0
    %232 = vmatprep.mubr.f32.mxu0 0.0
    %233 = vmatmul.mubr.f32.gmra.mrb[0].mxu0 %v166
    %v234 = vpop.f32.mrb[0].mxu0
    %v235 = vadd.f32 %v157, %v234
    %v236 = vpop.f32.mrb[0].mxu0
    %v237 = vadd.f32 %v161, %v236
    %238 = vdwg.mxu0
    %v239 = vmax.f32 %v235, 0.0
    %v240 = vmax.f32 %v237, 0.0
    %v241 = vld [vmem:[#allocation2] sm:$0xff]
    %v242 = vld [vmem:[#allocation2 + $0x8] sm:$0xff]
    %v243 = vld [vmem:[#allocation2 + $0x10] sm:$0xff]
    %v244 = vld [vmem:[#allocation2 + $0x18] sm:$0xff]
    %v245 = vld [vmem:[#allocation2 + $0x20] sm:$0xff]
    %v246 = vld [vmem:[#allocation2 + $0x28] sm:$0xff]
    %v247 = vld [vmem:[#allocation2 + $0x30] sm:$0xff]
    %v248 = vld [vmem:[#allocation2 + $0x38] sm:$0xff]
    %v249 = vld [vmem:[#allocation2 + $0x40] sm:$0xff]
    %v250 = vld [vmem:[#allocation2 + $0x48] sm:$0xff]
    %v251 = vld [vmem:[#allocation2 + $0x50] sm:$0xff]
    %v252 = vld [vmem:[#allocation2 + $0x58] sm:$0xff]
    %v253 = vld [vmem:[#allocation2 + $0x60] sm:$0xff]
    %v254 = vld [vmem:[#allocation2 + $0x68] sm:$0xff]
    %v255 = vld [vmem:[#allocation2 + $0x70] sm:$0xff]
    %v256 = vld [vmem:[#allocation2 + $0x78] sm:$0xff]
    %v257 = vld [vmem:[#allocation2 + $0x80] sm:$0xff]
    %v258 = vld [vmem:[#allocation2 + $0x88] sm:$0xff]
    %v259 = vld [vmem:[#allocation2 + $0x90] sm:$0xff]
    %v260 = vld [vmem:[#allocation2 + $0x98] sm:$0xff]
    %v261 = vld [vmem:[#allocation2 + $0xa0] sm:$0xff]
    %v262 = vld [vmem:[#allocation2 + $0xa8] sm:$0xff]
    %v263 = vld [vmem:[#allocation2 + $0xb0] sm:$0xff]
    %v264 = vld [vmem:[#allocation2 + $0xb8] sm:$0xff]
    %v265 = vld [vmem:[#allocation2 + $0xc0] sm:$0xff]
    %v266 = vld [vmem:[#allocation2 + $0xc8] sm:$0xff]
    %v267 = vld [vmem:[#allocation2 + $0xd0] sm:$0xff]
    %v268 = vld [vmem:[#allocation2 + $0xd8] sm:$0xff]
    %v269 = vld [vmem:[#allocation2 + $0xe0] sm:$0xff]
    %v270 = vld [vmem:[#allocation2 + $0xe8] sm:$0xff]
    %v271 = vld [vmem:[#allocation2 + $0xf0] sm:$0xff]
    %v272 = vld [vmem:[#allocation2 + $0xf8] sm:$0xff]
    %v273 = vld [vmem:[#allocation2 + $0x100] sm:$0xff]
    %v274 = vld [vmem:[#allocation2 + $0x108] sm:$0xff]
    %v275 = vld [vmem:[#allocation2 + $0x110] sm:$0xff]
    %v276 = vld [vmem:[#allocation2 + $0x118] sm:$0xff]
    %v277 = vld [vmem:[#allocation2 + $0x120] sm:$0xff]
    %v278 = vld [vmem:[#allocation2 + $0x128] sm:$0xff]
    %v279 = vld [vmem:[#allocation2 + $0x130] sm:$0xff]
    %v280 = vld [vmem:[#allocation2 + $0x138] sm:$0xff]
    %v281 = vld [vmem:[#allocation2 + $0x140] sm:$0xff]
    %v282 = vld [vmem:[#allocation2 + $0x148] sm:$0xff]
    %v283 = vld [vmem:[#allocation2 + $0x150] sm:$0xff]
    %v284 = vld [vmem:[#allocation2 + $0x158] sm:$0xff]
    %v285 = vld [vmem:[#allocation2 + $0x160] sm:$0xff]
    %v286 = vld [vmem:[#allocation2 + $0x168] sm:$0xff]
    %v287 = vld [vmem:[#allocation2 + $0x170] sm:$0xff]
    %v288 = vld [vmem:[#allocation2 + $0x178] sm:$0xff]
    %v289 = vld [vmem:[#allocation2 + $0x180] sm:$0xff]
    %v290 = vld [vmem:[#allocation2 + $0x188] sm:$0xff]
    %v291 = vld [vmem:[#allocation2 + $0x190] sm:$0xff]
    %v292 = vld [vmem:[#allocation2 + $0x198] sm:$0xff]
    %v293 = vld [vmem:[#allocation2 + $0x1a0] sm:$0xff]
    %v294 = vld [vmem:[#allocation2 + $0x1a8] sm:$0xff]
    %v295 = vld [vmem:[#allocation2 + $0x1b0] sm:$0xff]
    %v296 = vld [vmem:[#allocation2 + $0x1b8] sm:$0xff]
    %v297 = vld [vmem:[#allocation2 + $0x1c0] sm:$0xff]
    %v298 = vld [vmem:[#allocation2 + $0x1c8] sm:$0xff]
    %v299 = vld [vmem:[#allocation2 + $0x1d0] sm:$0xff]
    %v300 = vld [vmem:[#allocation2 + $0x1d8] sm:$0xff]
    %v301 = vld [vmem:[#allocation2 + $0x1e0] sm:$0xff]
    %v302 = vld [vmem:[#allocation2 + $0x1e8] sm:$0xff]
    %v303 = vld [vmem:[#allocation2 + $0x1f0] sm:$0xff]
    %v304 = vld [vmem:[#allocation2 + $0x1f8] sm:$0xff]
    %v305 = vld [vmem:[%s4] sm:$0x3]
    %v307 = vlaneseq
    %v308 = vshrl.u32 %v307, 7
    %v309 = vsub.s32 0, %v308
    %v310 = vrot.slane %v305, %v309
    %v311 = vlaneseq
    %v312 = vshrl.u32 %v311, 7
    %v313 = vsub.s32 1, %v312
    %v314 = vrot.slane %v305, %v313
    %317 = vmatprep.subr.mxu0 %v242
    %318 = vmatpush1.msra.mxu0 %v241
    %319 = vmatprep.subr.mxu0 %v244
    %320 = vmatpush1.msra.mxu0 %v243
    %321 = vmatprep.subr.mxu0 %v246
    %322 = vmatpush1.msra.mxu0 %v245
    %323 = vmatprep.subr.mxu0 %v248
    %324 = vmatpush1.msra.mxu0 %v247
    %325 = vmatprep.subr.mxu0 %v250
    %326 = vmatpush1.msra.mxu0 %v249
    %327 = vmatprep.subr.mxu0 %v252
    %328 = vmatpush1.msra.mxu0 %v251
    %329 = vmatprep.subr.mxu0 %v254
    %330 = vmatpush1.msra.mxu0 %v253
    %331 = vmatprep.subr.mxu0 %v256
    %332 = vmatpush1.msra.mxu0 %v255
    %333 = vmatprep.subr.mxu0 %v258
    %334 = vmatpush1.msra.mxu0 %v257
    %335 = vmatprep.subr.mxu0 %v260
    %336 = vmatpush1.msra.mxu0 %v259
    %337 = vmatprep.subr.mxu0 %v262
    %338 = vmatpush1.msra.mxu0 %v261
    %339 = vmatprep.subr.mxu0 %v264
    %340 = vmatpush1.msra.mxu0 %v263
    %341 = vmatprep.subr.mxu0 %v266
    %342 = vmatpush1.msra.mxu0 %v265
    %343 = vmatprep.subr.mxu0 %v268
    %344 = vmatpush1.msra.mxu0 %v267
    %345 = vmatprep.subr.mxu0 %v270
    %346 = vmatpush1.msra.mxu0 %v269
    %347 = vmatprep.subr.mxu0 %v272
    %348 = vmatpush1.msra.mxu0 %v271
    %349 = vmatprep.subr.mxu0 %v274
    %350 = vmatpush1.msra.mxu0 %v273
    %351 = vmatprep.subr.mxu0 %v276
    %352 = vmatpush1.msra.mxu0 %v275
    %353 = vmatprep.subr.mxu0 %v278
    %354 = vmatpush1.msra.mxu0 %v277
    %355 = vmatprep.subr.mxu0 %v280
    %356 = vmatpush1.msra.mxu0 %v279
    %357 = vmatprep.subr.mxu0 %v282
    %358 = vmatpush1.msra.mxu0 %v281
    %359 = vmatprep.subr.mxu0 %v284
    %360 = vmatpush1.msra.mxu0 %v283
    %361 = vmatprep.subr.mxu0 %v286
    %362 = vmatpush1.msra.mxu0 %v285
    %363 = vmatprep.subr.mxu0 %v288
    %364 = vmatpush1.msra.mxu0 %v287
    %365 = vmatprep.subr.mxu0 %v290
    %366 = vmatpush1.msra.mxu0 %v289
    %367 = vmatprep.subr.mxu0 %v292
    %368 = vmatpush1.msra.mxu0 %v291
    %369 = vmatprep.subr.mxu0 %v294
    %370 = vmatpush1.msra.mxu0 %v293
    %371 = vmatprep.subr.mxu0 %v296
    %372 = vmatpush1.msra.mxu0 %v295
    %373 = vmatprep.subr.mxu0 %v298
    %374 = vmatpush1.msra.mxu0 %v297
    %375 = vmatprep.subr.mxu0 %v300
    %376 = vmatpush1.msra.mxu0 %v299
    %377 = vmatprep.subr.mxu0 %v302
    %378 = vmatpush1.msra.mxu0 %v301
    %379 = vmatprep.subr.mxu0 %v304
    %380 = vmatpush1.msra.mxu0 %v303
    %381 = vmatprep.mubr.f32.mxu0 %v240
    %382 = vmatmul.mubr.f32.gmra.mrb[0].mxu0 %v239
    %v383 = vpop.f32.mrb[0].mxu0
    %v384 = vadd.f32 %v310, %v383
    %v385 = vpop.f32.mrb[0].mxu0
    %v386 = vadd.f32 %v314, %v385
    %387 = vdwg.mxu0
    %v388 = vmax.f32 %v384, 0.0
    %v389 = vmax.f32 %v386, 0.0
    %v390 = vld [vmem:[#allocation4] sm:$0xff]
    %v391 = vld [vmem:[#allocation4 + $0x8] sm:$0xff]
    %v392 = vld [vmem:[#allocation4 + $0x10] sm:$0xff]
    %v393 = vld [vmem:[#allocation4 + $0x18] sm:$0xff]
    %v394 = vld [vmem:[#allocation4 + $0x20] sm:$0xff]
    %v395 = vld [vmem:[#allocation4 + $0x28] sm:$0xff]
    %v396 = vld [vmem:[#allocation4 + $0x30] sm:$0xff]
    %v397 = vld [vmem:[#allocation4 + $0x38] sm:$0xff]
    %v398 = vld [vmem:[#allocation6] sm:$0x3]
    %v400 = vlaneseq
    %v401 = vshrl.u32 %v400, 7
    %v402 = vsub.s32 0, %v401
    %v403 = vrot.slane %v398, %v402
    %v404 = vlaneseq
    %v405 = vshrl.u32 %v404, 7
    %v406 = vsub.s32 1, %v405
    %v407 = vrot.slane %v398, %v406
    %410 = vmatprep.subr.mxu0 %v391
    %411 = vmatpush1.msra.mxu0 %v390
    %412 = vmatprep.subr.mxu0 %v393
    %413 = vmatpush1.msra.mxu0 %v392
    %414 = vmatprep.subr.mxu0 %v395
    %415 = vmatpush1.msra.mxu0 %v394
    %416 = vmatprep.subr.mxu0 %v397
    %417 = vmatpush1.msra.mxu0 %v396
    %418 = vmatprep.subr.mxu0 0.0
    %419 = vmatpush1.msra.mxu0 0.0
    %420 = vmatprep.subr.mxu0 0.0
    %421 = vmatpush1.msra.mxu0 0.0
    %422 = vmatprep.subr.mxu0 0.0
    %423 = vmatpush1.msra.mxu0 0.0
    %424 = vmatprep.subr.mxu0 0.0
    %425 = vmatpush1.msra.mxu0 0.0
    %426 = vmatprep.subr.mxu0 0.0
    %427 = vmatpush1.msra.mxu0 0.0
    %428 = vmatprep.subr.mxu0 0.0
    %429 = vmatpush1.msra.mxu0 0.0
    %430 = vmatprep.subr.mxu0 0.0
    %431 = vmatpush1.msra.mxu0 0.0
    %432 = vmatprep.subr.mxu0 0.0
    %433 = vmatpush1.msra.mxu0 0.0
    %434 = vmatprep.subr.mxu0 0.0
    %435 = vmatpush1.msra.mxu0 0.0
    %436 = vmatprep.subr.mxu0 0.0
    %437 = vmatpush1.msra.mxu0 0.0
    %438 = vmatprep.subr.mxu0 0.0
    %439 = vmatpush1.msra.mxu0 0.0
    %440 = vmatprep.subr.mxu0 0.0
    %441 = vmatpush1.msra.mxu0 0.0
    %442 = vmatprep.subr.mxu0 0.0
    %443 = vmatpush1.msra.mxu0 0.0
    %444 = vmatprep.subr.mxu0 0.0
    %445 = vmatpush1.msra.mxu0 0.0
    %446 = vmatprep.subr.mxu0 0.0
    %447 = vmatpush1.msra.mxu0 0.0
    %448 = vmatprep.subr.mxu0 0.0
    %449 = vmatpush1.msra.mxu0 0.0
    %450 = vmatprep.subr.mxu0 0.0
    %451 = vmatpush1.msra.mxu0 0.0
    %452 = vmatprep.subr.mxu0 0.0
    %453 = vmatpush1.msra.mxu0 0.0
    %454 = vmatprep.subr.mxu0 0.0
    %455 = vmatpush1.msra.mxu0 0.0
    %456 = vmatprep.subr.mxu0 0.0
    %457 = vmatpush1.msra.mxu0 0.0
    %458 = vmatprep.subr.mxu0 0.0
    %459 = vmatpush1.msra.mxu0 0.0
    %460 = vmatprep.subr.mxu0 0.0
    %461 = vmatpush1.msra.mxu0 0.0
    %462 = vmatprep.subr.mxu0 0.0
    %463 = vmatpush1.msra.mxu0 0.0
    %464 = vmatprep.subr.mxu0 0.0
    %465 = vmatpush1.msra.mxu0 0.0
    %466 = vmatprep.subr.mxu0 0.0
    %467 = vmatpush1.msra.mxu0 0.0
    %468 = vmatprep.subr.mxu0 0.0
    %469 = vmatpush1.msra.mxu0 0.0
    %470 = vmatprep.subr.mxu0 0.0
    %471 = vmatpush1.msra.mxu0 0.0
    %472 = vmatprep.subr.mxu0 0.0
    %473 = vmatpush1.msra.mxu0 0.0
    %474 = vmatprep.mubr.f32.mxu0 0.0
    %475 = vmatmul.mubr.f32.gmra.mrb[0].mxu0 %v166
    %v476 = vpop.f32.mrb[0].mxu0
    %v477 = vadd.f32 %v403, %v476
    %v478 = vpop.f32.mrb[0].mxu0
    %v479 = vadd.f32 %v407, %v478
    %480 = vdwg.mxu0
    %v481 = vadd.f32 %v388, %v477
    %v482 = vadd.f32 %v389, %v479
    %v483 = vmax.f32 %v481, 0.0
    %v484 = vmax.f32 %v482, 0.0
    %v485 = vld [vmem:[#allocation7] sm:$0xff]
    %v486 = vld [vmem:[#allocation7 + $0x8] sm:$0xff]
    %v487 = vld [vmem:[#allocation7 + $0x10] sm:$0xff]
    %v488 = vld [vmem:[#allocation7 + $0x18] sm:$0xff]
    %v489 = vld [vmem:[#allocation7 + $0x20] sm:$0xff]
    %v490 = vld [vmem:[#allocation7 + $0x28] sm:$0xff]
    %v491 = vld [vmem:[#allocation7 + $0x30] sm:$0xff]
    %v492 = vld [vmem:[#allocation7 + $0x38] sm:$0xff]
    %v493 = vld [vmem:[#allocation7 + $0x40] sm:$0xff]
    %v494 = vld [vmem:[#allocation7 + $0x48] sm:$0xff]
    %v495 = vld [vmem:[#allocation7 + $0x50] sm:$0xff]
    %v496 = vld [vmem:[#allocation7 + $0x58] sm:$0xff]
    %v497 = vld [vmem:[#allocation7 + $0x60] sm:$0xff]
    %v498 = vld [vmem:[#allocation7 + $0x68] sm:$0xff]
    %v499 = vld [vmem:[#allocation7 + $0x70] sm:$0xff]
    %v500 = vld [vmem:[#allocation7 + $0x78] sm:$0xff]
    %v501 = vld [vmem:[#allocation7 + $0x80] sm:$0xff]
    %v502 = vld [vmem:[#allocation7 + $0x88] sm:$0xff]
    %v503 = vld [vmem:[#allocation7 + $0x90] sm:$0xff]
    %v504 = vld [vmem:[#allocation7 + $0x98] sm:$0xff]
    %v505 = vld [vmem:[#allocation7 + $0xa0] sm:$0xff]
    %v506 = vld [vmem:[#allocation7 + $0xa8] sm:$0xff]
    %v507 = vld [vmem:[#allocation7 + $0xb0] sm:$0xff]
    %v508 = vld [vmem:[#allocation7 + $0xb8] sm:$0xff]
    %v509 = vld [vmem:[#allocation7 + $0xc0] sm:$0xff]
    %v510 = vld [vmem:[#allocation7 + $0xc8] sm:$0xff]
    %v511 = vld [vmem:[#allocation7 + $0xd0] sm:$0xff]
    %v512 = vld [vmem:[#allocation7 + $0xd8] sm:$0xff]
    %v513 = vld [vmem:[#allocation7 + $0xe0] sm:$0xff]
    %v514 = vld [vmem:[#allocation7 + $0xe8] sm:$0xff]
    %v515 = vld [vmem:[#allocation7 + $0xf0] sm:$0xff]
    %v516 = vld [vmem:[#allocation7 + $0xf8] sm:$0xff]
    %v517 = vld [vmem:[#allocation7 + $0x100] sm:$0xff]
    %v518 = vld [vmem:[#allocation7 + $0x108] sm:$0xff]
    %v519 = vld [vmem:[#allocation7 + $0x110] sm:$0xff]
    %v520 = vld [vmem:[#allocation7 + $0x118] sm:$0xff]
    %v521 = vld [vmem:[#allocation7 + $0x120] sm:$0xff]
    %v522 = vld [vmem:[#allocation7 + $0x128] sm:$0xff]
    %v523 = vld [vmem:[#allocation7 + $0x130] sm:$0xff]
    %v524 = vld [vmem:[#allocation7 + $0x138] sm:$0xff]
    %v525 = vld [vmem:[#allocation7 + $0x140] sm:$0xff]
    %v526 = vld [vmem:[#allocation7 + $0x148] sm:$0xff]
    %v527 = vld [vmem:[#allocation7 + $0x150] sm:$0xff]
    %v528 = vld [vmem:[#allocation7 + $0x158] sm:$0xff]
    %v529 = vld [vmem:[#allocation7 + $0x160] sm:$0xff]
    %v530 = vld [vmem:[#allocation7 + $0x168] sm:$0xff]
    %v531 = vld [vmem:[#allocation7 + $0x170] sm:$0xff]
    %v532 = vld [vmem:[#allocation7 + $0x178] sm:$0xff]
    %v533 = vld [vmem:[#allocation7 + $0x180] sm:$0xff]
    %v534 = vld [vmem:[#allocation7 + $0x188] sm:$0xff]
    %v535 = vld [vmem:[#allocation7 + $0x190] sm:$0xff]
    %v536 = vld [vmem:[#allocation7 + $0x198] sm:$0xff]
    %v537 = vld [vmem:[#allocation7 + $0x1a0] sm:$0xff]
    %v538 = vld [vmem:[#allocation7 + $0x1a8] sm:$0xff]
    %v539 = vld [vmem:[#allocation7 + $0x1b0] sm:$0xff]
    %v540 = vld [vmem:[#allocation7 + $0x1b8] sm:$0xff]
    %v541 = vld [vmem:[#allocation7 + $0x1c0] sm:$0xff]
    %v542 = vld [vmem:[#allocation7 + $0x1c8] sm:$0xff]
    %v543 = vld [vmem:[#allocation7 + $0x1d0] sm:$0xff]
    %v544 = vld [vmem:[#allocation7 + $0x1d8] sm:$0xff]
    %v545 = vld [vmem:[#allocation7 + $0x1e0] sm:$0xff]
    %v546 = vld [vmem:[#allocation7 + $0x1e8] sm:$0xff]
    %v547 = vld [vmem:[#allocation7 + $0x1f0] sm:$0xff]
    %v548 = vld [vmem:[#allocation7 + $0x1f8] sm:$0xff]
    %v549 = vld [vmem:[%s8] sm:$0x3]
    %v551 = vlaneseq
    %v552 = vshrl.u32 %v551, 7
    %v553 = vsub.s32 0, %v552
    %v554 = vrot.slane %v549, %v553
    %v555 = vlaneseq
    %v556 = vshrl.u32 %v555, 7
    %v557 = vsub.s32 1, %v556
    %v558 = vrot.slane %v549, %v557
    %561 = vmatprep.subr.mxu0 %v486
    %562 = vmatpush1.msra.mxu0 %v485
    %563 = vmatprep.subr.mxu0 %v488
    %564 = vmatpush1.msra.mxu0 %v487
    %565 = vmatprep.subr.mxu0 %v490
    %566 = vmatpush1.msra.mxu0 %v489
    %567 = vmatprep.subr.mxu0 %v492
    %568 = vmatpush1.msra.mxu0 %v491
    %569 = vmatprep.subr.mxu0 %v494
    %570 = vmatpush1.msra.mxu0 %v493
    %571 = vmatprep.subr.mxu0 %v496
    %572 = vmatpush1.msra.mxu0 %v495
    %573 = vmatprep.subr.mxu0 %v498
    %574 = vmatpush1.msra.mxu0 %v497
    %575 = vmatprep.subr.mxu0 %v500
    %576 = vmatpush1.msra.mxu0 %v499
    %577 = vmatprep.subr.mxu0 %v502
    %578 = vmatpush1.msra.mxu0 %v501
    %579 = vmatprep.subr.mxu0 %v504
    %580 = vmatpush1.msra.mxu0 %v503
    %581 = vmatprep.subr.mxu0 %v506
    %582 = vmatpush1.msra.mxu0 %v505
    %583 = vmatprep.subr.mxu0 %v508
    %584 = vmatpush1.msra.mxu0 %v507
    %585 = vmatprep.subr.mxu0 %v510
    %586 = vmatpush1.msra.mxu0 %v509
    %587 = vmatprep.subr.mxu0 %v512
    %588 = vmatpush1.msra.mxu0 %v511
    %589 = vmatprep.subr.mxu0 %v514
    %590 = vmatpush1.msra.mxu0 %v513
    %591 = vmatprep.subr.mxu0 %v516
    %592 = vmatpush1.msra.mxu0 %v515
    %593 = vmatprep.subr.mxu0 %v518
    %594 = vmatpush1.msra.mxu0 %v517
    %595 = vmatprep.subr.mxu0 %v520
    %596 = vmatpush1.msra.mxu0 %v519
    %597 = vmatprep.subr.mxu0 %v522
    %598 = vmatpush1.msra.mxu0 %v521
    %599 = vmatprep.subr.mxu0 %v524
    %600 = vmatpush1.msra.mxu0 %v523
    %601 = vmatprep.subr.mxu0 %v526
    %602 = vmatpush1.msra.mxu0 %v525
    %603 = vmatprep.subr.mxu0 %v528
    %604 = vmatpush1.msra.mxu0 %v527
    %605 = vmatprep.subr.mxu0 %v530
    %606 = vmatpush1.msra.mxu0 %v529
    %607 = vmatprep.subr.mxu0 %v532
    %608 = vmatpush1.msra.mxu0 %v531
    %609 = vmatprep.subr.mxu0 %v534
    %610 = vmatpush1.msra.mxu0 %v533
    %611 = vmatprep.subr.mxu0 %v536
    %612 = vmatpush1.msra.mxu0 %v535
    %613 = vmatprep.subr.mxu0 %v538
    %614 = vmatpush1.msra.mxu0 %v537
    %615 = vmatprep.subr.mxu0 %v540
    %616 = vmatpush1.msra.mxu0 %v539
    %617 = vmatprep.subr.mxu0 %v542
    %618 = vmatpush1.msra.mxu0 %v541
    %619 = vmatprep.subr.mxu0 %v544
    %620 = vmatpush1.msra.mxu0 %v543
    %621 = vmatprep.subr.mxu0 %v546
    %622 = vmatpush1.msra.mxu0 %v545
    %623 = vmatprep.subr.mxu0 %v548
    %624 = vmatpush1.msra.mxu0 %v547
    %625 = vmatprep.mubr.f32.mxu0 %v484
    %626 = vmatmul.mubr.f32.gmra.mrb[0].mxu0 %v483
    %v627 = vpop.f32.mrb[0].mxu0
    %v628 = vadd.f32 %v554, %v627
    %v629 = vpop.f32.mrb[0].mxu0
    %v630 = vadd.f32 %v558, %v629
    %631 = vdwg.mxu0
    %v632 = vmax.f32 %v628, 0.0
    %v633 = vmax.f32 %v630, 0.0
    %v634 = vld [vmem:[#allocation9] sm:$0xff]
    %v635 = vld [vmem:[#allocation9 + $0x8] sm:$0xff]
    %v636 = vld [vmem:[#allocation9 + $0x10] sm:$0xff]
    %v637 = vld [vmem:[#allocation9 + $0x18] sm:$0xff]
    %v638 = vld [vmem:[#allocation9 + $0x20] sm:$0xff]
    %v639 = vld [vmem:[#allocation9 + $0x28] sm:$0xff]
    %v640 = vld [vmem:[#allocation9 + $0x30] sm:$0xff]
    %v641 = vld [vmem:[#allocation9 + $0x38] sm:$0xff]
    %v642 = vld [vmem:[#allocation9 + $0x40] sm:$0xff]
    %v643 = vld [vmem:[#allocation9 + $0x48] sm:$0xff]
    %v644 = vld [vmem:[#allocation9 + $0x50] sm:$0xff]
    %v645 = vld [vmem:[#allocation9 + $0x58] sm:$0xff]
    %v646 = vld [vmem:[#allocation9 + $0x60] sm:$0xff]
    %v647 = vld [vmem:[#allocation9 + $0x68] sm:$0xff]
    %v648 = vld [vmem:[#allocation9 + $0x70] sm:$0xff]
    %v649 = vld [vmem:[#allocation9 + $0x78] sm:$0xff]
    %v650 = vld [vmem:[#allocation9 + $0x80] sm:$0xff]
    %v651 = vld [vmem:[#allocation9 + $0x88] sm:$0xff]
    %v652 = vld [vmem:[#allocation9 + $0x90] sm:$0xff]
    %v653 = vld [vmem:[#allocation9 + $0x98] sm:$0xff]
    %v654 = vld [vmem:[#allocation9 + $0xa0] sm:$0xff]
    %v655 = vld [vmem:[#allocation9 + $0xa8] sm:$0xff]
    %v656 = vld [vmem:[#allocation9 + $0xb0] sm:$0xff]
    %v657 = vld [vmem:[#allocation9 + $0xb8] sm:$0xff]
    %v658 = vld [vmem:[#allocation9 + $0xc0] sm:$0xff]
    %v659 = vld [vmem:[#allocation9 + $0xc8] sm:$0xff]
    %v660 = vld [vmem:[#allocation9 + $0xd0] sm:$0xff]
    %v661 = vld [vmem:[#allocation9 + $0xd8] sm:$0xff]
    %v662 = vld [vmem:[#allocation9 + $0xe0] sm:$0xff]
    %v663 = vld [vmem:[#allocation9 + $0xe8] sm:$0xff]
    %v664 = vld [vmem:[#allocation9 + $0xf0] sm:$0xff]
    %v665 = vld [vmem:[#allocation9 + $0xf8] sm:$0xff]
    %v666 = vld [vmem:[#allocation9 + $0x100] sm:$0xff]
    %v667 = vld [vmem:[#allocation9 + $0x108] sm:$0xff]
    %v668 = vld [vmem:[#allocation9 + $0x110] sm:$0xff]
    %v669 = vld [vmem:[#allocation9 + $0x118] sm:$0xff]
    %v670 = vld [vmem:[#allocation9 + $0x120] sm:$0xff]
    %v671 = vld [vmem:[#allocation9 + $0x128] sm:$0xff]
    %v672 = vld [vmem:[#allocation9 + $0x130] sm:$0xff]
    %v673 = vld [vmem:[#allocation9 + $0x138] sm:$0xff]
    %v674 = vld [vmem:[#allocation9 + $0x140] sm:$0xff]
    %v675 = vld [vmem:[#allocation9 + $0x148] sm:$0xff]
    %v676 = vld [vmem:[#allocation9 + $0x150] sm:$0xff]
    %v677 = vld [vmem:[#allocation9 + $0x158] sm:$0xff]
    %v678 = vld [vmem:[#allocation9 + $0x160] sm:$0xff]
    %v679 = vld [vmem:[#allocation9 + $0x168] sm:$0xff]
    %v680 = vld [vmem:[#allocation9 + $0x170] sm:$0xff]
    %v681 = vld [vmem:[#allocation9 + $0x178] sm:$0xff]
    %v682 = vld [vmem:[#allocation9 + $0x180] sm:$0xff]
    %v683 = vld [vmem:[#allocation9 + $0x188] sm:$0xff]
    %v684 = vld [vmem:[#allocation9 + $0x190] sm:$0xff]
    %v685 = vld [vmem:[#allocation9 + $0x198] sm:$0xff]
    %v686 = vld [vmem:[#allocation9 + $0x1a0] sm:$0xff]
    %v687 = vld [vmem:[#allocation9 + $0x1a8] sm:$0xff]
    %v688 = vld [vmem:[#allocation9 + $0x1b0] sm:$0xff]
    %v689 = vld [vmem:[#allocation9 + $0x1b8] sm:$0xff]
    %v690 = vld [vmem:[#allocation9 + $0x1c0] sm:$0xff]
    %v691 = vld [vmem:[#allocation9 + $0x1c8] sm:$0xff]
    %v692 = vld [vmem:[#allocation9 + $0x1d0] sm:$0xff]
    %v693 = vld [vmem:[#allocation9 + $0x1d8] sm:$0xff]
    %v694 = vld [vmem:[#allocation9 + $0x1e0] sm:$0xff]
    %v695 = vld [vmem:[#allocation9 + $0x1e8] sm:$0xff]
    %v696 = vld [vmem:[#allocation9 + $0x1f0] sm:$0xff]
    %v697 = vld [vmem:[#allocation9 + $0x1f8] sm:$0xff]
    %v698 = vld [vmem:[%s10] sm:$0x3]
    %v700 = vlaneseq
    %v701 = vshrl.u32 %v700, 7
    %v702 = vsub.s32 0, %v701
    %v703 = vrot.slane %v698, %v702
    %v704 = vlaneseq
    %v705 = vshrl.u32 %v704, 7
    %v706 = vsub.s32 1, %v705
    %v707 = vrot.slane %v698, %v706
    %710 = vmatprep.subr.mxu0 %v635
    %711 = vmatpush1.msra.mxu0 %v634
    %712 = vmatprep.subr.mxu0 %v637
    %713 = vmatpush1.msra.mxu0 %v636
    %714 = vmatprep.subr.mxu0 %v639
    %715 = vmatpush1.msra.mxu0 %v638
    %716 = vmatprep.subr.mxu0 %v641
    %717 = vmatpush1.msra.mxu0 %v640
    %718 = vmatprep.subr.mxu0 %v643
    %719 = vmatpush1.msra.mxu0 %v642
    %720 = vmatprep.subr.mxu0 %v645
    %721 = vmatpush1.msra.mxu0 %v644
    %722 = vmatprep.subr.mxu0 %v647
    %723 = vmatpush1.msra.mxu0 %v646
    %724 = vmatprep.subr.mxu0 %v649
    %725 = vmatpush1.msra.mxu0 %v648
    %726 = vmatprep.subr.mxu0 %v651
    %727 = vmatpush1.msra.mxu0 %v650
    %728 = vmatprep.subr.mxu0 %v653
    %729 = vmatpush1.msra.mxu0 %v652
    %730 = vmatprep.subr.mxu0 %v655
    %731 = vmatpush1.msra.mxu0 %v654
    %732 = vmatprep.subr.mxu0 %v657
    %733 = vmatpush1.msra.mxu0 %v656
    %734 = vmatprep.subr.mxu0 %v659
    %735 = vmatpush1.msra.mxu0 %v658
    %736 = vmatprep.subr.mxu0 %v661
    %737 = vmatpush1.msra.mxu0 %v660
    %738 = vmatprep.subr.mxu0 %v663
    %739 = vmatpush1.msra.mxu0 %v662
    %740 = vmatprep.subr.mxu0 %v665
    %741 = vmatpush1.msra.mxu0 %v664
    %742 = vmatprep.subr.mxu0 %v667
    %743 = vmatpush1.msra.mxu0 %v666
    %744 = vmatprep.subr.mxu0 %v669
    %745 = vmatpush1.msra.mxu0 %v668
    %746 = vmatprep.subr.mxu0 %v671
    %747 = vmatpush1.msra.mxu0 %v670
    %748 = vmatprep.subr.mxu0 %v673
    %749 = vmatpush1.msra.mxu0 %v672
    %750 = vmatprep.subr.mxu0 %v675
    %751 = vmatpush1.msra.mxu0 %v674
    %752 = vmatprep.subr.mxu0 %v677
    %753 = vmatpush1.msra.mxu0 %v676
    %754 = vmatprep.subr.mxu0 %v679
    %755 = vmatpush1.msra.mxu0 %v678
    %756 = vmatprep.subr.mxu0 %v681
    %757 = vmatpush1.msra.mxu0 %v680
    %758 = vmatprep.subr.mxu0 %v683
    %759 = vmatpush1.msra.mxu0 %v682
    %760 = vmatprep.subr.mxu0 %v685
    %761 = vmatpush1.msra.mxu0 %v684
    %762 = vmatprep.subr.mxu0 %v687
    %763 = vmatpush1.msra.mxu0 %v686
    %764 = vmatprep.subr.mxu0 %v689
    %765 = vmatpush1.msra.mxu0 %v688
    %766 = vmatprep.subr.mxu0 %v691
    %767 = vmatpush1.msra.mxu0 %v690
    %768 = vmatprep.subr.mxu0 %v693
    %769 = vmatpush1.msra.mxu0 %v692
    %770 = vmatprep.subr.mxu0 %v695
    %771 = vmatpush1.msra.mxu0 %v694
    %772 = vmatprep.subr.mxu0 %v697
    %773 = vmatpush1.msra.mxu0 %v696
    %774 = vmatprep.mubr.f32.mxu0 %v633
    %775 = vmatmul.mubr.f32.gmra.mrb[0].mxu0 %v632
    %v776 = vpop.f32.mrb[0].mxu0
    %v777 = vadd.f32 %v703, %v776
    %v778 = vpop.f32.mrb[0].mxu0
    %v779 = vadd.f32 %v707, %v778
    %780 = vdwg.mxu0
    %v781 = vmax.f32 %v777, 0.0
    %v782 = vmax.f32 %v779, 0.0
    %v783 = vadd.f32 %v781, %v483
    %v784 = vadd.f32 %v782, %v484
    %v785 = vmax.f32 %v783, 0.0
    %v786 = vmax.f32 %v784, 0.0
    %v787 = vmax.f32 %v785, 0.0
    %v788 = vmax.f32 %v786, 0.0
    %v789 = vld [vmem:[#allocation10] sm:$0xff]
    %v790 = vld [vmem:[#allocation10 + $0x8] sm:$0xff]
    %v791 = vld [vmem:[#allocation10 + $0x10] sm:$0xff]
    %v792 = vld [vmem:[#allocation10 + $0x18] sm:$0xff]
    %v793 = vld [vmem:[#allocation10 + $0x20] sm:$0xff]
    %v794 = vld [vmem:[#allocation10 + $0x28] sm:$0xff]
    %v795 = vld [vmem:[#allocation10 + $0x30] sm:$0xff]
    %v796 = vld [vmem:[#allocation10 + $0x38] sm:$0xff]
    %v797 = vld [vmem:[#allocation10 + $0x40] sm:$0xff]
    %v798 = vld [vmem:[#allocation10 + $0x48] sm:$0xff]
    %v799 = vld [vmem:[#allocation10 + $0x50] sm:$0xff]
    %v800 = vld [vmem:[#allocation10 + $0x58] sm:$0xff]
    %v801 = vld [vmem:[#allocation10 + $0x60] sm:$0xff]
    %v802 = vld [vmem:[#allocation10 + $0x68] sm:$0xff]
    %v803 = vld [vmem:[#allocation10 + $0x70] sm:$0xff]
    %v804 = vld [vmem:[#allocation10 + $0x78] sm:$0xff]
    %v805 = vld [vmem:[#allocation10 + $0x80] sm:$0xff]
    %v806 = vld [vmem:[#allocation10 + $0x88] sm:$0xff]
    %v807 = vld [vmem:[#allocation10 + $0x90] sm:$0xff]
    %v808 = vld [vmem:[#allocation10 + $0x98] sm:$0xff]
    %v809 = vld [vmem:[#allocation10 + $0xa0] sm:$0xff]
    %v810 = vld [vmem:[#allocation10 + $0xa8] sm:$0xff]
    %v811 = vld [vmem:[#allocation10 + $0xb0] sm:$0xff]
    %v812 = vld [vmem:[#allocation10 + $0xb8] sm:$0xff]
    %v813 = vld [vmem:[#allocation10 + $0xc0] sm:$0xff]
    %v814 = vld [vmem:[#allocation10 + $0xc8] sm:$0xff]
    %v815 = vld [vmem:[#allocation10 + $0xd0] sm:$0xff]
    %v816 = vld [vmem:[#allocation10 + $0xd8] sm:$0xff]
    %v817 = vld [vmem:[#allocation10 + $0xe0] sm:$0xff]
    %v818 = vld [vmem:[#allocation10 + $0xe8] sm:$0xff]
    %v819 = vld [vmem:[#allocation10 + $0xf0] sm:$0xff]
    %v820 = vld [vmem:[#allocation10 + $0xf8] sm:$0xff]
    %v821 = vld [vmem:[%s12] sm:$0x1]
    %v823 = vlaneseq
    %v824 = vshrl.u32 %v823, 7
    %v825 = vsub.s32 0, %v824
    %v826 = vrot.slane %v821, %v825
    %828 = vmatprep.subr.mxu0 0.0
    %829 = vmatpush1.msra.mxu0 %v789
    %830 = vmatprep.subr.mxu0 0.0
    %831 = vmatpush1.msra.mxu0 %v790
    %832 = vmatprep.subr.mxu0 0.0
    %833 = vmatpush1.msra.mxu0 %v791
    %834 = vmatprep.subr.mxu0 0.0
    %835 = vmatpush1.msra.mxu0 %v792
    %836 = vmatprep.subr.mxu0 0.0
    %837 = vmatpush1.msra.mxu0 %v793
    %838 = vmatprep.subr.mxu0 0.0
    %839 = vmatpush1.msra.mxu0 %v794
    %840 = vmatprep.subr.mxu0 0.0
    %841 = vmatpush1.msra.mxu0 %v795
    %842 = vmatprep.subr.mxu0 0.0
    %843 = vmatpush1.msra.mxu0 %v796
    %844 = vmatprep.subr.mxu0 0.0
    %845 = vmatpush1.msra.mxu0 %v797
    %846 = vmatprep.subr.mxu0 0.0
    %847 = vmatpush1.msra.mxu0 %v798
    %848 = vmatprep.subr.mxu0 0.0
    %849 = vmatpush1.msra.mxu0 %v799
    %850 = vmatprep.subr.mxu0 0.0
    %851 = vmatpush1.msra.mxu0 %v800
    %852 = vmatprep.subr.mxu0 0.0
    %853 = vmatpush1.msra.mxu0 %v801
    %854 = vmatprep.subr.mxu0 0.0
    %855 = vmatpush1.msra.mxu0 %v802
    %856 = vmatprep.subr.mxu0 0.0
    %857 = vmatpush1.msra.mxu0 %v803
    %858 = vmatprep.subr.mxu0 0.0
    %859 = vmatpush1.msra.mxu0 %v804
    %860 = vmatprep.subr.mxu0 0.0
    %861 = vmatpush1.msra.mxu0 %v805
    %862 = vmatprep.subr.mxu0 0.0
    %863 = vmatpush1.msra.mxu0 %v806
    %864 = vmatprep.subr.mxu0 0.0
    %865 = vmatpush1.msra.mxu0 %v807
    %866 = vmatprep.subr.mxu0 0.0
    %867 = vmatpush1.msra.mxu0 %v808
    %868 = vmatprep.subr.mxu0 0.0
    %869 = vmatpush1.msra.mxu0 %v809
    %870 = vmatprep.subr.mxu0 0.0
    %871 = vmatpush1.msra.mxu0 %v810
    %872 = vmatprep.subr.mxu0 0.0
    %873 = vmatpush1.msra.mxu0 %v811
    %874 = vmatprep.subr.mxu0 0.0
    %875 = vmatpush1.msra.mxu0 %v812
    %876 = vmatprep.subr.mxu0 0.0
    %877 = vmatpush1.msra.mxu0 %v813
    %878 = vmatprep.subr.mxu0 0.0
    %879 = vmatpush1.msra.mxu0 %v814
    %880 = vmatprep.subr.mxu0 0.0
    %881 = vmatpush1.msra.mxu0 %v815
    %882 = vmatprep.subr.mxu0 0.0
    %883 = vmatpush1.msra.mxu0 %v816
    %884 = vmatprep.subr.mxu0 0.0
    %885 = vmatpush1.msra.mxu0 %v817
    %886 = vmatprep.subr.mxu0 0.0
    %887 = vmatpush1.msra.mxu0 %v818
    %888 = vmatprep.subr.mxu0 0.0
    %889 = vmatpush1.msra.mxu0 %v819
    %890 = vmatprep.subr.mxu0 0.0
    %891 = vmatpush1.msra.mxu0 %v820
    %892 = vmatprep.mubr.f32.mxu0 %v788
    %893 = vmatmul.mubr.f32.gmra.mrb[0].mxu0 %v787
    %v894 = vpop.f32.mrb[0].mxu0
    %v895 = vadd.f32 %v826, %v894
    %v896 = vpop.f32.mrb[0].mxu0
    %897 = vdwg.mxu0
    %v898 = vmax.f32 %v895, 0.0
    %v899 = vld [vmem:[#allocation12] sm:$0xff]
    %v900 = vld [vmem:[#allocation12 + $0x8] sm:$0xff]
    %v901 = vld [vmem:[#allocation12 + $0x10] sm:$0xff]
    %v902 = vld [vmem:[#allocation12 + $0x18] sm:$0xff]
    %v903 = vld [vmem:[#allocation12 + $0x20] sm:$0xff]
    %v904 = vld [vmem:[#allocation12 + $0x28] sm:$0xff]
    %v905 = vld [vmem:[#allocation12 + $0x30] sm:$0xff]
    %v906 = vld [vmem:[#allocation12 + $0x38] sm:$0xff]
    %v907 = vld [vmem:[#allocation12 + $0x40] sm:$0xff]
    %v908 = vld [vmem:[#allocation12 + $0x48] sm:$0xff]
    %v909 = vld [vmem:[#allocation12 + $0x50] sm:$0xff]
    %v910 = vld [vmem:[#allocation12 + $0x58] sm:$0xff]
    %v911 = vld [vmem:[#allocation12 + $0x60] sm:$0xff]
    %v912 = vld [vmem:[#allocation12 + $0x68] sm:$0xff]
    %v913 = vld [vmem:[#allocation12 + $0x70] sm:$0xff]
    %v914 = vld [vmem:[#allocation12 + $0x78] sm:$0xff]
    %v915 = vld [vmem:[%s14] sm:$0x1]
    %v917 = vlaneseq
    %v918 = vshrl.u32 %v917, 7
    %v919 = vsub.s32 0, %v918
    %v920 = vrot.slane %v915, %v919
    %922 = vmatprep.subr.mxu0 0.0
    %923 = vmatpush1.msra.mxu0 %v899
    %924 = vmatprep.subr.mxu0 0.0
    %925 = vmatpush1.msra.mxu0 %v900
    %926 = vmatprep.subr.mxu0 0.0
    %927 = vmatpush1.msra.mxu0 %v901
    %928 = vmatprep.subr.mxu0 0.0
    %929 = vmatpush1.msra.mxu0 %v902
    %930 = vmatprep.subr.mxu0 0.0
    %931 = vmatpush1.msra.mxu0 %v903
    %932 = vmatprep.subr.mxu0 0.0
    %933 = vmatpush1.msra.mxu0 %v904
    %934 = vmatprep.subr.mxu0 0.0
    %935 = vmatpush1.msra.mxu0 %v905
    %936 = vmatprep.subr.mxu0 0.0
    %937 = vmatpush1.msra.mxu0 %v906
    %938 = vmatprep.subr.mxu0 0.0
    %939 = vmatpush1.msra.mxu0 %v907
    %940 = vmatprep.subr.mxu0 0.0
    %941 = vmatpush1.msra.mxu0 %v908
    %942 = vmatprep.subr.mxu0 0.0
    %943 = vmatpush1.msra.mxu0 %v909
    %944 = vmatprep.subr.mxu0 0.0
    %945 = vmatpush1.msra.mxu0 %v910
    %946 = vmatprep.subr.mxu0 0.0
    %947 = vmatpush1.msra.mxu0 %v911
    %948 = vmatprep.subr.mxu0 0.0
    %949 = vmatpush1.msra.mxu0 %v912
    %950 = vmatprep.subr.mxu0 0.0
    %951 = vmatpush1.msra.mxu0 %v913
    %952 = vmatprep.subr.mxu0 0.0
    %953 = vmatpush1.msra.mxu0 %v914
    %954 = vmatprep.subr.mxu0 0.0
    %955 = vmatpush1.msra.mxu0 0.0
    %956 = vmatprep.subr.mxu0 0.0
    %957 = vmatpush1.msra.mxu0 0.0
    %958 = vmatprep.subr.mxu0 0.0
    %959 = vmatpush1.msra.mxu0 0.0
    %960 = vmatprep.subr.mxu0 0.0
    %961 = vmatpush1.msra.mxu0 0.0
    %962 = vmatprep.subr.mxu0 0.0
    %963 = vmatpush1.msra.mxu0 0.0
    %964 = vmatprep.subr.mxu0 0.0
    %965 = vmatpush1.msra.mxu0 0.0
    %966 = vmatprep.subr.mxu0 0.0
    %967 = vmatpush1.msra.mxu0 0.0
    %968 = vmatprep.subr.mxu0 0.0
    %969 = vmatpush1.msra.mxu0 0.0
    %970 = vmatprep.subr.mxu0 0.0
    %971 = vmatpush1.msra.mxu0 0.0
    %972 = vmatprep.subr.mxu0 0.0
    %973 = vmatpush1.msra.mxu0 0.0
    %974 = vmatprep.subr.mxu0 0.0
    %975 = vmatpush1.msra.mxu0 0.0
    %976 = vmatprep.subr.mxu0 0.0
    %977 = vmatpush1.msra.mxu0 0.0
    %978 = vmatprep.subr.mxu0 0.0
    %979 = vmatpush1.msra.mxu0 0.0
    %980 = vmatprep.subr.mxu0 0.0
    %981 = vmatpush1.msra.mxu0 0.0
    %982 = vmatprep.subr.mxu0 0.0
    %983 = vmatpush1.msra.mxu0 0.0
    %984 = vmatprep.subr.mxu0 0.0
    %985 = vmatpush1.msra.mxu0 0.0
    %986 = vmatprep.mubr.f32.mxu0 0.0
    %987 = vmatmul.mubr.f32.gmra.mrb[0].mxu0 %v898
    %v988 = vpop.f32.mrb[0].mxu0
    %v989 = vadd.f32 %v920, %v988
    %v990 = vpop.f32.mrb[0].mxu0
    %991 = vdwg.mxu0
    %992 = vst [vmem:[%s15] sm:$0xff] %v989
    // Predicated region
    $region90: #{multistep_tcn_forward.1} parent=1 // pred_check
      _
    $region91: #{multistep_tcn_forward.1} parent=1 // pred_check_branch
      %994 = sbr.rel (0) target = $region93
    $region92: #{multistep_tcn_forward.1} parent=1 // pred_region
      _
    $region93: #{multistep_tcn_forward.1} parent=1 // pred_fallthru
      _
    // Predicated region
    $region94: #{multistep_tcn_forward.1} parent=1 // pred_check
      _
    $region95: #{multistep_tcn_forward.1} parent=1 // pred_check_branch
      %996 = sbr.rel (0) target = $region97
    $region96: #{multistep_tcn_forward.1} parent=1 // pred_region
      _
    $region97: #{multistep_tcn_forward.1} parent=1 // pred_fallthru
      _
    %997 = vsyncpa [#allocation3], 1
    %998 = vsyncpa [#allocation5], 1
    %999 = vsyncpa [#allocation8], 1
    %1000 = vsyncpa [#allocation11], 1

</llo_original>
